<compile_context>
chip_gen: v7x
topology: tpu7x:2x2x1
jax: 0.10.0
libtpu: 0.0.40
codegen_flags: <defaults>
</compile_context>

<pallas_src>
import functools
import math

import jax
import jax.numpy as jnp
from jax import lax
from jax.experimental import pallas as pl
from jax.experimental.pallas import tpu as pltpu

# Large finite negative: exp underflows to exactly 0, no inf-inf NaN risk.
_MASK = -1e30


def _round_up(x, m):
    return ((x + m - 1) // m) * m


def _flash_attn_kernel(q_ref, k_ref, v_ref, o_ref, q_sc, m_sc, l_sc, acc_sc,
                       *, scale, lk, tk, need_mask, l_col):
    # q_ref: (tq, Dp), k_ref: (tk, Dp), v_ref: (tk, Dvp), o_ref: (tq, Dvp)
    ki = pl.program_id(2)
    last_k = pl.num_programs(2) - 1

    @pl.when(ki == 0)
    def _init():
        # Q is resident across the whole k sweep: fold 1/sqrt(d) into it once
        # instead of rescaling the Q tile on every k step.
        q_sc[...] = q_ref[...] * jnp.asarray(scale, dtype=q_ref.dtype)
        m_sc[...] = jnp.full_like(m_sc, _MASK)
        acc_sc[...] = jnp.zeros_like(acc_sc)
        if l_col is None:
            l_sc[...] = jnp.zeros_like(l_sc)

    # scores = (scale*Q) @ K^T -> (tq, tk); contract D on both sides (no K
    # transpose through the XLU), f32 accumulation on the MXU.
    s = lax.dot_general(q_sc[...], k_ref[...], (((1,), (1,)), ((), ())),
                        preferred_element_type=jnp.float32)

    if need_mask:
        # Only the last k tile can contain padded key columns: pay the
        # iota/cmp/select only on that step.
        def _mask_cols(x):
            col = ki * tk + lax.broadcasted_iota(jnp.int32, x.shape, 1)
            return jnp.where(col < lk, x, _MASK)

        s = lax.cond(ki == last_k, _mask_cols, lambda x: x, s)

    # Online softmax update.
    m_prev = m_sc[...]
    m_new = jnp.maximum(m_prev, jnp.max(s, axis=-1, keepdims=True))
    alpha = jnp.exp(m_prev - m_new)
    # TODO(synk): on v6e/v7x (bf16 EUP) compute this exp in bf16 if a bundle
    #             dump shows the EUP as the saturating slot; keep f32 on v5e.
    p = jnp.exp(s - m_new)

    if l_col is None:
        # No padded V lane available: classic XLU row-sum for the denominator.
        l_sc[...] = alpha * l_sc[...] + jnp.sum(p, axis=-1, keepdims=True)
    # else: V carries a column of ones at lane `l_col`, so that column of the
    # accumulator *is* the running denominator (row-sum done by the MXU).
    acc_sc[...] = alpha * acc_sc[...] + jnp.dot(
        p.astype(v_ref.dtype), v_ref[...], preferred_element_type=jnp.float32)
    m_sc[...] = m_new

    @pl.when(ki == last_k)
    def _finalize():
        if l_col is None:
            l = l_sc[...]
        else:
            l = acc_sc[:, l_col:l_col + 1]
        # Exact divide, once per q tile -> essentially free; exact parity with
        # the PyTorch softmax reference (no approx-reciprocal error).
        o_ref[...] = (acc_sc[...] / l).astype(o_ref.dtype)


def dot_product_attention(queries, keys, values, *, tq=1024, tk=1024,
                          matmul_dtype=None):
    """out = softmax(Q @ K^T / sqrt(d)) @ V   (dropout_p == 0 -> identity).

    queries: (B, Lq, D), keys: (B, Lk, D), values: (B, Lk, Dv) -> (B, Lq, Dv)
    """
    out_dtype = queries.dtype
    if matmul_dtype is not None:
        # Optional (recommended on v5e for f32 callers): bf16 MXU operands with
        # f32 accumulation; also halves K/V HBM traffic.
        queries = queries.astype(matmul_dtype)
        keys = keys.astype(matmul_dtype)
        values = values.astype(matmul_dtype)

    B, Lq, D = queries.shape
    Bk, Lk, Dk = keys.shape
    Bv, Lkv, Dv = values.shape
    assert B == Bk == Bv and D == Dk and Lk == Lkv

    # Sublane multiple depends on dtype packing (f32: 8, bf16: 16, int8/fp8: 32).
    itemsize = jnp.dtype(queries.dtype).itemsize
    sub = {4: 8, 2: 16, 1: 32}.get(itemsize, 8)

    # Lane-dense feature dims; tile-aligned sequence dims.
    Dp = _round_up(D, 128)
    Dvp = _round_up(Dv, 128)

    # Big Q tiles: K/V are re-streamed from HBM only n_q = Lq_p/tq times.
    # When B == 1, clamp tq so B*n_q >= 2 and both v7x TCs get grid work.
    tq = min(tq, _round_up(Lq, sub))
    if B == 1 and _round_up(Lq, sub) >= 2 * sub:
        tq = min(tq, _round_up((Lq + 1) // 2, sub))
    tk = min(tk, _round_up(Lk, sub))

    Lq_p = _round_up(Lq, tq)
    Lk_p = _round_up(Lk, tk)

    def _pad(x, rows, cols):
        r, c = x.shape[1], x.shape[2]
        if r == rows and c == cols:
            return x
        return jnp.pad(x, ((0, 0), (0, rows - r), (0, cols - c)))

    q = _pad(queries, Lq_p, Dp)   # zero-padded D contributes 0 to QK^T
    k = _pad(keys, Lk_p, Dp)
    v = _pad(values, Lk_p, Dvp)   # padded Dv lanes are sliced off below

    # If V has padded lanes, plant a column of ones in the first padded lane:
    # its accumulator column becomes the softmax denominator (per-step row-sum
    # moved off the XLU onto the MXU for free).  Skip when Dv % 128 == 0.
    l_col = None
    if Dvp > Dv:
        l_col = Dv
        v = v.at[:, :, Dv].set(jnp.asarray(1, v.dtype))

    n_q = Lq_p // tq
    n_k = Lk_p // tk
    scale = 1.0 / math.sqrt(D)

    kernel = functools.partial(
        _flash_attn_kernel,
        scale=scale, lk=Lk, tk=tk, need_mask=(Lk_p != Lk), l_col=l_col)

    out_itemsize = jnp.dtype(out_dtype).itemsize
    # bytes_accessed reflects real HBM traffic: Q/out once, K/V n_q times.
    cost = pl.CostEstimate(
        flops=int(2 * B * Lq_p * Lk_p * Dp + 2 * B * Lq_p * Lk_p * Dvp),
        transcendentals=int(B * Lq_p * Lk_p),
        bytes_accessed=int(q.size * itemsize
                           + (k.size + v.size) * itemsize * n_q
                           + B * Lq_p * Dvp * out_itemsize),
    )

    out = pl.pallas_call(
        kernel,
        out_shape=jax.ShapeDtypeStruct((B, Lq_p, Dvp), out_dtype),
        grid_spec=pltpu.PrefetchScalarGridSpec(
            num_scalar_prefetch=0,
            grid=(B, n_q, n_k),
            in_specs=[
                pl.BlockSpec((pl.Squeezed(), tq, Dp),
                             lambda b, qi, ki: (b, qi, 0)),
                # TODO(synk): sweep pipeline_mode=pl.Buffered(3) on K/V if a
                #             trace still shows exposed per-step DMA.
                pl.BlockSpec((pl.Squeezed(), tk, Dp),
                             lambda b, qi, ki: (b, ki, 0)),
                pl.BlockSpec((pl.Squeezed(), tk, Dvp),
                             lambda b, qi, ki: (b, ki, 0)),
            ],
            out_specs=pl.BlockSpec((pl.Squeezed(), tq, Dvp),
                                   lambda b, qi, ki: (b, qi, 0)),
            scratch_shapes=[
                pltpu.VMEM((tq, Dp), q.dtype),       # scale * Q (resident)
                pltpu.VMEM((tq, 1), jnp.float32),    # running max
                pltpu.VMEM((tq, 1), jnp.float32),    # running sum (unused if l_col)
                pltpu.VMEM((tq, Dvp), jnp.float32),  # output accumulator
            ],
        ),
        compiler_params=pltpu.CompilerParams(
            dimension_semantics=("parallel", "parallel", "arbitrary"),
            vmem_limit_bytes=48 * 1024 * 1024,
        ),
        cost_estimate=cost,
    )(q, k, v)

    return out[:, :Lq, :Dv]


def _reference(queries, keys, values):
    d = queries.shape[-1]
    scores = jnp.einsum("bqd,bkd->bqk", queries.astype(jnp.float32),
                        keys.astype(jnp.float32)) / math.sqrt(d)
    attn = jax.nn.softmax(scores, axis=-1)
    return jnp.einsum("bqk,bkv->bqv", attn, values.astype(jnp.float32))


if __name__ == "__main__":
    # Test 1: small shapes consistent with the module (batch=2, seq=8, d=32);
    # exercises the ones-column denominator path (Dv % 128 != 0).
    key = jax.random.PRNGKey(0)
    kq, kk, kv = jax.random.split(key, 3)
    B, Lq, Lk, D, Dv = 2, 8, 8, 32, 32
    queries = jax.random.normal(kq, (B, Lq, D), dtype=jnp.float32)
    keys = jax.random.normal(kk, (B, Lk, D), dtype=jnp.float32)
    values = jax.random.normal(kv, (B, Lk, Dv), dtype=jnp.float32)

    out = jax.block_until_ready(dot_product_attention(queries, keys, values))
    ref = _reference(queries, keys, values)
    assert out.shape == (B, Lq, Dv)
    assert jnp.allclose(out, ref, atol=1e-3, rtol=1e-3), "mismatch (test 1)"

    # Test 2: multi q/k tiles, last-step key masking, B==1 megacore clamp.
    key2 = jax.random.PRNGKey(1)
    kq2, kk2, kv2 = jax.random.split(key2, 3)
    B2, Lq2, Lk2, D2, Dv2 = 1, 40, 24, 32, 48
    q2 = jax.random.normal(kq2, (B2, Lq2, D2), dtype=jnp.float32)
    k2 = jax.random.normal(kk2, (B2, Lk2, D2), dtype=jnp.float32)
    v2 = jax.random.normal(kv2, (B2, Lk2, Dv2), dtype=jnp.float32)
    out2 = jax.block_until_ready(dot_product_attention(q2, k2, v2, tq=16, tk=16))
    ref2 = _reference(q2, k2, v2)
    assert out2.shape == (B2, Lq2, Dv2)
    assert jnp.allclose(out2, ref2, atol=1e-3, rtol=1e-3), "mismatch (test 2)"

    # Test 3: Dv == 128 (no padded V lanes) -> classic row-sum denominator path.
    key3 = jax.random.PRNGKey(2)
    kq3, kk3, kv3 = jax.random.split(key3, 3)
    B3, Lq3, Lk3, D3, Dv3 = 2, 8, 8, 32, 128
    q3 = jax.random.normal(kq3, (B3, Lq3, D3), dtype=jnp.float32)
    k3 = jax.random.normal(kk3, (B3, Lk3, D3), dtype=jnp.float32)
    v3 = jax.random.normal(kv3, (B3, Lk3, Dv3), dtype=jnp.float32)
    out3 = jax.block_until_ready(dot_product_attention(q3, k3, v3))
    ref3 = _reference(q3, k3, v3)
    assert out3.shape == (B3, Lq3, Dv3)
    assert jnp.allclose(out3, ref3, atol=1e-3, rtol=1e-3), "mismatch (test 3)"

    print("KERNEL_OK")
</pallas_src>

<mosaic_0001>
module attributes {stable_mosaic.version = 11 : i64} {
  func.func @_flash_attn_kernel(%arg0: i32, %arg1: i32, %arg2: i32, %arg3: memref<1x8x128xf32, #tpu.memory_space<vmem>>, %arg4: memref<1x8x128xf32, #tpu.memory_space<vmem>>, %arg5: memref<1x8x128xf32, #tpu.memory_space<vmem>>, %arg6: memref<1x8x128xf32, #tpu.memory_space<vmem>>, %arg7: memref<8x128xf32, #tpu.memory_space<vmem>>, %arg8: memref<8x1xf32, #tpu.memory_space<vmem>>, %arg9: memref<8x1xf32, #tpu.memory_space<vmem>>, %arg10: memref<8x128xf32, #tpu.memory_space<vmem>>) attributes {dimension_semantics = [#tpu.dimension_semantics<parallel>, #tpu.dimension_semantics<parallel>, #tpu.dimension_semantics<arbitrary>], iteration_bounds = array<i64: 2, 1, 1>, scalar_prefetch = 0 : i64, scratch_operands = 4 : i64, tpu.core_type = #tpu.core_type<tc>, window_params = [{transform_indices = @transform_0, window_bounds = array<i64: 1, 8, 128>}, {transform_indices = @transform_1, window_bounds = array<i64: 1, 8, 128>}, {transform_indices = @transform_2, window_bounds = array<i64: 1, 8, 128>}, {transform_indices = @transform_3, window_bounds = array<i64: 1, 8, 128>}]} {
    %c0_i32 = arith.constant 0 : i32
    %0 = arith.cmpi eq, %arg2, %c0_i32 : i32
    %1 = arith.extui %0 : i1 to i32
    %c0_i32_0 = arith.constant 0 : i32
    %2 = arith.cmpi ne, %1, %c0_i32_0 : i32
    scf.if %2 {
      %c0_20 = arith.constant 0 : index
      %c0_21 = arith.constant 0 : index
      %c0_22 = arith.constant 0 : index
      %28 = vector.load %arg3[%c0_20, %c0_21, %c0_22] : memref<1x8x128xf32, #tpu.memory_space<vmem>>, vector<1x8x128xf32>
      %29 = vector.shape_cast %28 : vector<1x8x128xf32> to vector<8x128xf32>
      %cst_23 = arith.constant 0.176776692 : f32
      %30 = vector.broadcast %cst_23 : f32 to vector<8x128xf32>
      %31 = arith.mulf %29, %30 : vector<8x128xf32>
      %c0_24 = arith.constant 0 : index
      %c0_25 = arith.constant 0 : index
      %32 = vector.load %arg7[%c0_24, %c0_25] : memref<8x128xf32, #tpu.memory_space<vmem>>, vector<8x128xf32>
      tpu.vector_store %arg7[%c0_24, %c0_25], %31 {strides = array<i32>} : memref<8x128xf32, #tpu.memory_space<vmem>>, vector<8x128xf32>,
      %cst_26 = arith.constant -1.000000e+30 : f32
      %33 = vector.broadcast %cst_26 : f32 to vector<8x1xf32>
      %c0_27 = arith.constant 0 : index
      %c0_28 = arith.constant 0 : index
      %34 = vector.load %arg8[%c0_27, %c0_28] : memref<8x1xf32, #tpu.memory_space<vmem>>, vector<8x1xf32>
      tpu.vector_store %arg8[%c0_27, %c0_28], %33 {strides = array<i32>} : memref<8x1xf32, #tpu.memory_space<vmem>>, vector<8x1xf32>,
      %cst_29 = arith.constant 0.000000e+00 : f32
      %35 = vector.broadcast %cst_29 : f32 to vector<8x128xf32>
      %c0_30 = arith.constant 0 : index
      %c0_31 = arith.constant 0 : index
      %36 = vector.load %arg10[%c0_30, %c0_31] : memref<8x128xf32, #tpu.memory_space<vmem>>, vector<8x128xf32>
      tpu.vector_store %arg10[%c0_30, %c0_31], %35 {strides = array<i32>} : memref<8x128xf32, #tpu.memory_space<vmem>>, vector<8x128xf32>,
    } else {
    }
    %c0 = arith.constant 0 : index
    %c0_1 = arith.constant 0 : index
    %3 = vector.load %arg7[%c0, %c0_1] : memref<8x128xf32, #tpu.memory_space<vmem>>, vector<8x128xf32>
    %c0_2 = arith.constant 0 : index
    %c0_3 = arith.constant 0 : index
    %c0_4 = arith.constant 0 : index
    %4 = vector.load %arg4[%c0_2, %c0_3, %c0_4] : memref<1x8x128xf32, #tpu.memory_space<vmem>>, vector<1x8x128xf32>
    %5 = vector.shape_cast %4 : vector<1x8x128xf32> to vector<8x128xf32>
    %cst = arith.constant dense<0.000000e+00> : vector<8x8xf32>
    %6 = tpu.matmul %3, %5, %cst {dimension_numbers = #tpu.dot_dimension_numbers<[1], [1], [0], [0], [0, 0, 1, 0], [], []>} : vector<8x128xf32>, vector<8x128xf32>, vector<8x8xf32> -> vector<8x8xf32>
    %c0_5 = arith.constant 0 : index
    %c0_6 = arith.constant 0 : index
    %7 = vector.load %arg8[%c0_5, %c0_6] : memref<8x1xf32, #tpu.memory_space<vmem>>, vector<8x1xf32>
    %cst_7 = arith.constant dense<0xFF800000> : vector<8xf32>
    %8 = vector.multi_reduction <maximumf>, %6, %cst_7 [1] : vector<8x8xf32> to vector<8xf32>
    %9 = vector.shape_cast %8 : vector<8xf32> to vector<8x1xf32>
    %10 = arith.maximumf %7, %9 : vector<8x1xf32>
    %11 = arith.subf %7, %10 : vector<8x1xf32>
    %12 = math.exp %11 : vector<8x1xf32>
    %13 = vector.broadcast %10 : vector<8x1xf32> to vector<8x8xf32>
    %14 = arith.subf %6, %13 : vector<8x8xf32>
    %15 = math.exp %14 : vector<8x8xf32>
    %c0_8 = arith.constant 0 : index
    %c0_9 = arith.constant 0 : index
    %16 = vector.load %arg10[%c0_8, %c0_9] : memref<8x128xf32, #tpu.memory_space<vmem>>, vector<8x128xf32>
    %17 = vector.broadcast %12 : vector<8x1xf32> to vector<8x128xf32>
    %18 = arith.mulf %17, %16 : vector<8x128xf32>
    %c0_10 = arith.constant 0 : index
    %c0_11 = arith.constant 0 : index
    %c0_12 = arith.constant 0 : index
    %19 = vector.load %arg5[%c0_10, %c0_11, %c0_12] : memref<1x8x128xf32, #tpu.memory_space<vmem>>, vector<1x8x128xf32>
    %20 = vector.shape_cast %19 : vector<1x8x128xf32> to vector<8x128xf32>
    %cst_13 = arith.constant dense<0.000000e+00> : vector<8x128xf32>
    %21 = tpu.matmul %15, %20, %cst_13 {dimension_numbers = #tpu.dot_dimension_numbers<[1], [0], [0], [1], [0, 0, 1, 1], [], []>} : vector<8x8xf32>, vector<8x128xf32>, vector<8x128xf32> -> vector<8x128xf32>
    %22 = arith.addf %18, %21 : vector<8x128xf32>
    %c0_14 = arith.constant 0 : index
    %c0_15 = arith.constant 0 : index
    %23 = vector.load %arg10[%c0_14, %c0_15] : memref<8x128xf32, #tpu.memory_space<vmem>>, vector<8x128xf32>
    tpu.vector_store %arg10[%c0_14, %c0_15], %22 {strides = array<i32>} : memref<8x128xf32, #tpu.memory_space<vmem>>, vector<8x128xf32>,
    %c0_16 = arith.constant 0 : index
    %c0_17 = arith.constant 0 : index
    %24 = vector.load %arg8[%c0_16, %c0_17] : memref<8x1xf32, #tpu.memory_space<vmem>>, vector<8x1xf32>
    tpu.vector_store %arg8[%c0_16, %c0_17], %10 {strides = array<i32>} : memref<8x1xf32, #tpu.memory_space<vmem>>, vector<8x1xf32>,
    %c0_i32_18 = arith.constant 0 : i32
    %25 = arith.cmpi eq, %arg2, %c0_i32_18 : i32
    %26 = arith.extui %25 : i1 to i32
    %c0_i32_19 = arith.constant 0 : i32
    %27 = arith.cmpi ne, %26, %c0_i32_19 : i32
    scf.if %27 {
      %c0_20 = arith.constant 0 : index
      %c32 = arith.constant 32 : index
      %28 = vector.load %arg10[%c0_20, %c32] : memref<8x128xf32, #tpu.memory_space<vmem>>, vector<8x1xf32>
      %c0_21 = arith.constant 0 : index
      %c0_22 = arith.constant 0 : index
      %29 = vector.load %arg10[%c0_21, %c0_22] : memref<8x128xf32, #tpu.memory_space<vmem>>, vector<8x128xf32>
      %30 = vector.broadcast %28 : vector<8x1xf32> to vector<8x128xf32>
      %31 = arith.divf %29, %30 : vector<8x128xf32>
      %c0_23 = arith.constant 0 : index
      %c0_24 = arith.constant 0 : index
      %c0_25 = arith.constant 0 : index
      %32 = vector.load %arg6[%c0_23, %c0_24, %c0_25] : memref<1x8x128xf32, #tpu.memory_space<vmem>>, vector<1x8x128xf32>
      %33 = vector.shape_cast %32 : vector<1x8x128xf32> to vector<8x128xf32>
      %34 = vector.shape_cast %31 : vector<8x128xf32> to vector<1x8x128xf32>
      tpu.vector_store %arg6[%c0_23, %c0_24, %c0_25], %34 {strides = array<i32>} : memref<1x8x128xf32, #tpu.memory_space<vmem>>, vector<1x8x128xf32>,
    } else {
    }
    return
  }
  func.func @transform_0(%arg0: i32, %arg1: i32, %arg2: i32) -> (i32, i32, i32) {
    %c0_i32 = arith.constant 0 : i32
    %c0_i32_0 = arith.constant 0 : i32
    return %arg0, %arg1, %c0_i32 : i32, i32, i32
  }
  func.func @transform_1(%arg0: i32, %arg1: i32, %arg2: i32) -> (i32, i32, i32) {
    %c0_i32 = arith.constant 0 : i32
    %c0_i32_0 = arith.constant 0 : i32
    return %arg0, %arg2, %c0_i32 : i32, i32, i32
  }
  func.func @transform_2(%arg0: i32, %arg1: i32, %arg2: i32) -> (i32, i32, i32) {
    %c0_i32 = arith.constant 0 : i32
    %c0_i32_0 = arith.constant 0 : i32
    return %arg0, %arg2, %c0_i32 : i32, i32, i32
  }
  func.func @transform_3(%arg0: i32, %arg1: i32, %arg2: i32) -> (i32, i32, i32) {
    %c0_i32 = arith.constant 0 : i32
    %c0_i32_0 = arith.constant 0 : i32
    return %arg0, %arg1, %c0_i32 : i32, i32, i32
  }
}

</mosaic_0001>

<llo_original>
// kernel: tpu_custom_call.1
$region0: #{tpu_custom_call.1}
  #allocation0 [shape = 'u32[]', space=smem, size = 0x4, offset = 0x4, fixed_abs, tag = 'smem constant byte address 0x4 - core index']
  #allocation1 [shape = 'u32[144,128]{1,0:T(1,128)}', space=vmem, size = 0x12000, scoped, tag = 'internal scratch']
  #allocation2 [shape = 'f32[8,128]{1,0:T(8,128)}', space=vmem, size = 0x1000, scoped, tag = 'scratch operand']
  #allocation3 [shape = 'f32[8,1]{1,0:T(8,128)}', space=vmem, size = 0x1000, scoped, tag = 'scratch operand']
  #allocation4 [shape = 'f32[8,1]{1,0:T(8,128)}', space=vmem, size = 0x1000, scoped, tag = 'scratch operand']
  #allocation5 [shape = 'f32[8,128]{1,0:T(8,128)}', space=vmem, size = 0x1000, scoped, tag = 'scratch operand']
  %s0 = inlined_call_operand.hbm [shape: f32[2,8,128], index: 0, kind: input, shape index: {}]
  %s1 = inlined_call_operand.hbm [shape: f32[2,8,128], index: 1, kind: input, shape index: {}]
  %s2 = inlined_call_operand.hbm [shape: f32[2,8,128], index: 2, kind: input, shape index: {}]
  %s3 = inlined_call_operand.hbm [shape: f32[2,8,128], index: 3, kind: output, shape index: {}]
  %s4 = sld [smem:[#allocation0]]
  $region65: #{tpu_custom_call.1} parent=0
    _
  %s6 = ssub.s32 1, %s4
  %s7 = scalar_select 0, %s6, %s4
  $region1: #{tpu_custom_call.1} parent=0
    #allocation6 [shape = 'u8[8192]{0}', space=vmem, size = 0x2000, scoped, tag = 'input window, operand 0']
    #allocation7 [shape = 's32[2]{0}', space=sflag, size = 0x8, scoped, tag = 'scoped memory for tpu_custom_call.1']
    #allocation8 [shape = 's32[2]{0}', space=sflag, size = 0x8, scoped, tag = 'scoped memory for tpu_custom_call.1']
    #allocation9 [shape = 'u8[8192]{0}', space=vmem, size = 0x2000, scoped, tag = 'input window, operand 1']
    #allocation10 [shape = 's32[2]{0}', space=sflag, size = 0x8, scoped, tag = 'scoped memory for tpu_custom_call.1']
    #allocation11 [shape = 'u8[8192]{0}', space=vmem, size = 0x2000, scoped, tag = 'input window, operand 2']
    #allocation12 [shape = 'u8[8192]{0}', space=vmem, size = 0x2000, scoped, tag = 'output window, operand 0']
    %8 = vsyncpa [#allocation7], 0
    %s9 = scalar_lea.sflag [#allocation7], 1
    %10 = vsyncpa %s9, 0
    %11 = vsyncpa [#allocation10], 0
    %s12 = scalar_lea.sflag [#allocation10], 1
    %13 = vsyncpa %s12, 0
    %14 = vsyncpa [#allocation8], 0
    %s15 = scalar_lea.sflag [#allocation8], 1
    %16 = vsyncpa %s15, 0
    loop: start=0, step=1, limit=4
    $region2: #{tpu_custom_call.1} parent=1 // loop_pre_header
      _
    $region3: #{tpu_custom_call.1} parent=1 // loop_header
      %s18 = sphi 0, %s22
      %p19 = scmp.ge.s32.totalorder %s18, 4
      %s25 = sphi 0, %s44
      %s26 = sphi 0, %s40
      %s27 = sphi 0, %s36
      %s28 = sphi 0, %s25
      %s29 = sphi 0, %s26
      %s30 = sphi 0, %s27
      %s31 = sphi 0, %s28
      %s32 = sphi 0, %s29
      %s33 = sphi 0, %s30
      %s49 = sphi 0, %s51
      %s52 = sphi 0, %s49
      %s53 = sphi 0, %s52
      %s69 = sphi 0, %s53
      %s77 = sphi 0, %s79
      %s80 = sphi 0, %s77
      %s81 = sphi 0, %s80
      %s97 = sphi 0, %s81
      %s105 = sphi 0, %s107
      %s108 = sphi 0, %s105
      %s109 = sphi 0, %s108
      %s125 = sphi 0, %s109
      %s133 = sphi 0, %s135
      %s136 = sphi 0, %s133
      %s137 = sphi 0, %s136
      %s153 = sphi 0, %s137
    $region4: #{tpu_custom_call.1} parent=1 // loop_header_branch
      %21 = sbr.rel (%p19) target = $region8
    $region5: #{tpu_custom_call.1} parent=1 // loop_body
      %s23 = ssub.s32 %s18, 1
      %s24 = ssub.s32 %s18, 2
      %s34 = sadd.s32 1, %s27
      %p35 = scmp.ge.s32.totalorder %s34, 1
      %s36 = scalar_select %p35, 0, %s34
      %s37 = sadd.s32 1, %s26
      %s38 = scalar_select %p35, %s37, %s26
      %p39 = scmp.ge.s32.totalorder %s38, 1
      %s40 = scalar_select %p39, 0, %s38
      %s41 = sadd.s32 1, %s25
      %s42 = scalar_select %p39, %s41, %s25
      %p43 = scmp.ge.s32.totalorder %s42, 2
      %s44 = scalar_select %p43, 0, %s42
      %s45 = ssub.s32 %s25, %s44
      %s46 = ssub.s32 %s26, %s40
      %s47 = sor.u32 %s45, %s46
      %p48 = scmp.eq.s32.totalorder %s47, 0
      %s50 = sadd.s32 %s49, 1
      %s51 = scalar_select %p48, %s49, %s50
      %p54 = pneg %p48
      %p55 = scmp.eq.s32.totalorder %s18, 1
      %p56 = por %p54, %p55
      %p57 = scmp.ne.s32.totalorder %s49, %s52
      %p58 = scmp.eq.s32.totalorder %s18, 0
      %p59 = por %p57, %p58
      %p60 = scmp.ne.s32.totalorder %s49, %s52
      %p61 = scmp.eq.s32.totalorder %s23, 1
      %p62 = por %p60, %p61
      %p63 = scmp.ne.s32.totalorder %s52, %s53
      %p64 = scmp.eq.s32.totalorder %s23, 0
      %p65 = por %p63, %p64
      %p66 = scmp.ne.s32.totalorder %s52, %s53
      %p67 = scmp.eq.s32.totalorder %s24, 1
      %p68 = por %p66, %p67
      %p70 = scmp.ne.s32.totalorder %s53, %s69
      %p71 = scmp.eq.s32.totalorder %s24, 0
      %p72 = por %p70, %p71
      %s73 = ssub.s32 %s25, %s44
      %s74 = ssub.s32 %s27, %s36
      %s75 = sor.u32 %s73, %s74
      %p76 = scmp.eq.s32.totalorder %s75, 0
      %s78 = sadd.s32 %s77, 1
      %s79 = scalar_select %p76, %s77, %s78
      %p82 = pneg %p76
      %p83 = scmp.eq.s32.totalorder %s18, 1
      %p84 = por %p82, %p83
      %p85 = scmp.ne.s32.totalorder %s77, %s80
      %p86 = scmp.eq.s32.totalorder %s18, 0
      %p87 = por %p85, %p86
      %p88 = scmp.ne.s32.totalorder %s77, %s80
      %p89 = scmp.eq.s32.totalorder %s23, 1
      %p90 = por %p88, %p89
      %p91 = scmp.ne.s32.totalorder %s80, %s81
      %p92 = scmp.eq.s32.totalorder %s23, 0
      %p93 = por %p91, %p92
      %p94 = scmp.ne.s32.totalorder %s80, %s81
      %p95 = scmp.eq.s32.totalorder %s24, 1
      %p96 = por %p94, %p95
      %p98 = scmp.ne.s32.totalorder %s81, %s97
      %p99 = scmp.eq.s32.totalorder %s24, 0
      %p100 = por %p98, %p99
      %s101 = ssub.s32 %s25, %s44
      %s102 = ssub.s32 %s27, %s36
      %s103 = sor.u32 %s101, %s102
      %p104 = scmp.eq.s32.totalorder %s103, 0
      %s106 = sadd.s32 %s105, 1
      %s107 = scalar_select %p104, %s105, %s106
      %p110 = pneg %p104
      %p111 = scmp.eq.s32.totalorder %s18, 1
      %p112 = por %p110, %p111
      %p113 = scmp.ne.s32.totalorder %s105, %s108
      %p114 = scmp.eq.s32.totalorder %s18, 0
      %p115 = por %p113, %p114
      %p116 = scmp.ne.s32.totalorder %s105, %s108
      %p117 = scmp.eq.s32.totalorder %s23, 1
      %p118 = por %p116, %p117
      %p119 = scmp.ne.s32.totalorder %s108, %s109
      %p120 = scmp.eq.s32.totalorder %s23, 0
      %p121 = por %p119, %p120
      %p122 = scmp.ne.s32.totalorder %s108, %s109
      %p123 = scmp.eq.s32.totalorder %s24, 1
      %p124 = por %p122, %p123
      %p126 = scmp.ne.s32.totalorder %s109, %s125
      %p127 = scmp.eq.s32.totalorder %s24, 0
      %p128 = por %p126, %p127
      %s129 = ssub.s32 %s25, %s44
      %s130 = ssub.s32 %s26, %s40
      %s131 = sor.u32 %s129, %s130
      %p132 = scmp.eq.s32.totalorder %s131, 0
      %s134 = sadd.s32 %s133, 1
      %s135 = scalar_select %p132, %s133, %s134
      %p138 = pneg %p132
      %p139 = scmp.eq.s32.totalorder %s18, 1
      %p140 = por %p138, %p139
      %p141 = scmp.ne.s32.totalorder %s133, %s136
      %p142 = scmp.eq.s32.totalorder %s18, 0
      %p143 = por %p141, %p142
      %p144 = scmp.ne.s32.totalorder %s133, %s136
      %p145 = scmp.eq.s32.totalorder %s23, 1
      %p146 = por %p144, %p145
      %p147 = scmp.ne.s32.totalorder %s136, %s137
      %p148 = scmp.eq.s32.totalorder %s23, 0
      %p149 = por %p147, %p148
      %p150 = scmp.ne.s32.totalorder %s136, %s137
      %p151 = scmp.eq.s32.totalorder %s24, 1
      %p152 = por %p150, %p151
      %p154 = scmp.ne.s32.totalorder %s137, %s153
      %p155 = scmp.eq.s32.totalorder %s24, 0
      %p156 = por %p154, %p155
      %p157 = scmp.le.s32.totalorder 1, %s18
      %p158 = scmp.lt.s32.totalorder %s18, 3
      %p159 = pnand %p157, %p158
      %p160 = pneg %p159
      // Predicated region
      $region9: #{tpu_custom_call.1} parent=5 // pred_check
        _
      $region10: #{tpu_custom_call.1} parent=5 // pred_check_branch
        %162 = sbr.rel (%p159) target = $region12
      $region11: #{tpu_custom_call.1} parent=5 // pred_region
        %s163 = ssub.s32 %s18, 1
      $region12: #{tpu_custom_call.1} parent=5 // pred_fallthru
        _
      %p164 = scmp.lt.s32.totalorder %s18, 2
      // Predicated region
      $region13: #{tpu_custom_call.1} parent=5 // pred_check
        %p165 = pneg %p164
      $region14: #{tpu_custom_call.1} parent=5 // pred_check_branch
        %167 = sbr.rel (%p165) target = $region16
      $region15: #{tpu_custom_call.1} parent=5 // pred_region
        // Predicated region
        $region17: #{tpu_custom_call.1} parent=15 // pred_check
          %p168 = pneg %p59
        $region18: #{tpu_custom_call.1} parent=15 // pred_check_branch
          %170 = sbr.rel (%p168) target = $region20
        $region19: #{tpu_custom_call.1} parent=15 // pred_region
          %s171 = sand.u32 %s49, 1
          %s172 = scalar_lea.sflag [#allocation7], %s171
          %s173 = sand.u32 %s49, 1
          %s174 = smul.addr %s173, 8
          %s175 = scalar_lea.vmem [#allocation6], %s174
          %s177 = ssub.s32 128, 128
          %178 = vsyncadd %s172, %s177
          %s179 = sadd.s32 %s26, %s25
          %s180 = smul.addr %s179, 128
          %s181 = scalar_lea.hbm %s0, %s180
          %s183 = sshll.u32 %s175, 4
          %s184 = int_to_ptr.vmem [resolvable:$true] %s183
          %186 = dma.hbm_to_vmem [thread:$0]  %s181, 128, %s184, %s172
        $region20: #{tpu_custom_call.1} parent=15 // pred_fallthru
          _
        // Predicated region
        $region21: #{tpu_custom_call.1} parent=15 // pred_check
          %p187 = pneg %p87
        $region22: #{tpu_custom_call.1} parent=15 // pred_check_branch
          %189 = sbr.rel (%p187) target = $region24
        $region23: #{tpu_custom_call.1} parent=15 // pred_region
          %s190 = sand.u32 %s18, 1
          %s191 = scalar_lea.sflag [#allocation10], %s190
          %s192 = sand.u32 %s77, 1
          %s193 = smul.addr %s192, 8
          %s194 = scalar_lea.vmem [#allocation9], %s193
          %s196 = ssub.s32 128, 128
          %197 = vsyncadd %s191, %s196
          %s198 = sadd.s32 %s27, %s25
          %s199 = smul.addr %s198, 128
          %s200 = scalar_lea.hbm %s1, %s199
          %s202 = sshll.u32 %s194, 4
          %s203 = int_to_ptr.vmem [resolvable:$true] %s202
          %205 = dma.hbm_to_vmem [thread:$0]  %s200, 128, %s203, %s191
        $region24: #{tpu_custom_call.1} parent=15 // pred_fallthru
          _
        // Predicated region
        $region25: #{tpu_custom_call.1} parent=15 // pred_check
          %p206 = pneg %p115
        $region26: #{tpu_custom_call.1} parent=15 // pred_check_branch
          %208 = sbr.rel (%p206) target = $region28
        $region27: #{tpu_custom_call.1} parent=15 // pred_region
          %s209 = sand.u32 %s18, 1
          %s210 = scalar_lea.sflag [#allocation10], %s209
          %s211 = sand.u32 %s105, 1
          %s212 = smul.addr %s211, 8
          %s213 = scalar_lea.vmem [#allocation11], %s212
          %s215 = ssub.s32 128, 128
          %216 = vsyncadd %s210, %s215
          %s217 = sadd.s32 %s27, %s25
          %s218 = smul.addr %s217, 128
          %s219 = scalar_lea.hbm %s2, %s218
          %s221 = sshll.u32 %s213, 4
          %s222 = int_to_ptr.vmem [resolvable:$true] %s221
          %224 = dma.hbm_to_vmem [thread:$0]  %s219, 128, %s222, %s210
        $region28: #{tpu_custom_call.1} parent=15 // pred_fallthru
          _
      $region16: #{tpu_custom_call.1} parent=5 // pred_fallthru
        _
      %p225 = scmp.le.s32.totalorder 1, %s18
      %p226 = scmp.lt.s32.totalorder %s18, 3
      %p227 = pnand %p225, %p226
      %p228 = pneg %p227
      // Predicated region
      $region29: #{tpu_custom_call.1} parent=5 // pred_check
        _
      $region30: #{tpu_custom_call.1} parent=5 // pred_check_branch
        %230 = sbr.rel (%p227) target = $region32
      $region31: #{tpu_custom_call.1} parent=5 // pred_region
        %s231 = ssub.s32 %s18, 1
        %s232 = sand.u32 %s52, 1
        %s233 = scalar_lea.sflag [#allocation7], %s232
        %s234 = sand.u32 %s52, 1
        %s235 = smul.addr %s234, 8
        %s236 = scalar_lea.vmem [#allocation6], %s235
        // Predicated region
        $region33: #{tpu_custom_call.1} parent=31 // pred_check
          %p237 = pneg %p65
        $region34: #{tpu_custom_call.1} parent=31 // pred_check_branch
          %239 = sbr.rel (%p237) target = $region36
        $region35: #{tpu_custom_call.1} parent=31 // pred_region
          %240 = dma.done %s233, 128
        $region36: #{tpu_custom_call.1} parent=31 // pred_fallthru
          _
        %s241 = sand.u32 %s23, 1
        %s242 = scalar_lea.sflag [#allocation10], %s241
        %s243 = sand.u32 %s80, 1
        %s244 = smul.addr %s243, 8
        %s245 = scalar_lea.vmem [#allocation9], %s244
        // Predicated region
        $region37: #{tpu_custom_call.1} parent=31 // pred_check
          %p246 = pneg %p93
        $region38: #{tpu_custom_call.1} parent=31 // pred_check_branch
          %248 = sbr.rel (%p246) target = $region40
        $region39: #{tpu_custom_call.1} parent=31 // pred_region
          %249 = dma.done %s242, 128
        $region40: #{tpu_custom_call.1} parent=31 // pred_fallthru
          _
        %s250 = sand.u32 %s23, 1
        %s251 = scalar_lea.sflag [#allocation10], %s250
        %s252 = sand.u32 %s108, 1
        %s253 = smul.addr %s252, 8
        %s254 = scalar_lea.vmem [#allocation11], %s253
        // Predicated region
        $region41: #{tpu_custom_call.1} parent=31 // pred_check
          %p255 = pneg %p121
        $region42: #{tpu_custom_call.1} parent=31 // pred_check_branch
          %257 = sbr.rel (%p255) target = $region44
        $region43: #{tpu_custom_call.1} parent=31 // pred_region
          %258 = dma.done %s251, 128
        $region44: #{tpu_custom_call.1} parent=31 // pred_fallthru
          _
        %s259 = sand.u32 %s52, 1
        %s260 = scalar_lea.sflag [#allocation7], %s259
        %s261 = sand.u32 %s52, 1
        %s262 = smul.addr %s261, 8
        %s263 = scalar_lea.vmem [#allocation6], %s262
        %p264 = pneg %p65
        %p265 = pneg %p62
        %s266 = sand.u32 %s23, 1
        %s267 = scalar_lea.sflag [#allocation10], %s266
        %s268 = sand.u32 %s80, 1
        %s269 = smul.addr %s268, 8
        %s270 = scalar_lea.vmem [#allocation9], %s269
        %p271 = pneg %p93
        %p272 = pneg %p90
        %s273 = sand.u32 %s23, 1
        %s274 = scalar_lea.sflag [#allocation10], %s273
        %s275 = sand.u32 %s108, 1
        %s276 = smul.addr %s275, 8
        %s277 = scalar_lea.vmem [#allocation11], %s276
        %p278 = pneg %p121
        %p279 = pneg %p118
        %p280 = pneg %p149
        %p281 = pneg %p146
        %s282 = sand.u32 %s136, 1
        %s283 = scalar_lea.sflag [#allocation8], %s282
        %s284 = sand.u32 %s136, 1
        %s285 = smul.addr %s284, 8
        %s286 = scalar_lea.vmem [#allocation12], %s285
        %p287 = scmp.eq.s32.totalorder %s30, 0
        // Predicated region
        $region45: #{tpu_custom_call.1} parent=31 // pred_check
          %p288 = pneg %p287
        $region46: #{tpu_custom_call.1} parent=31 // pred_check_branch
          %290 = sbr.rel (%p288) target = $region48
        $region47: #{tpu_custom_call.1} parent=31 // pred_region
          %v291 = vld [vmem:[%s236] sm:$0xff]
          %v292 = vmul.f32 %v291, 0.17677669
          %293 = vst [vmem:[#allocation2] sm:$0xff] %v292
          %vm294 = vcmask 7168
          %295 = vst.msk [vmem:[#allocation3] sm:$0xff] %vm294, -1e+30
          %296 = vst [vmem:[#allocation5] sm:$0xff] 0.0
        $region48: #{tpu_custom_call.1} parent=31 // pred_fallthru
          _
        %v297 = vld [vmem:[#allocation2] sm:$0xff]
        %v298 = vld [vmem:[%s245] sm:$0xff]
        %299 = vmatprep.subr.mxu0 0.0
        %300 = vmatpush1.xpose.msra.mxu0 %v298
        %301 = vmatprep.subr.mxu0 0.0
        %302 = vmatpush1.xpose.msra.mxu0 0.0
        %303 = vmatprep.subr.mxu0 0.0
        %304 = vmatpush1.xpose.msra.mxu0 0.0
        %305 = vmatprep.subr.mxu0 0.0
        %306 = vmatpush1.xpose.msra.mxu0 0.0
        %307 = vmatprep.subr.mxu0 0.0
        %308 = vmatpush1.xpose.msra.mxu0 0.0
        %309 = vmatprep.subr.mxu0 0.0
        %310 = vmatpush1.xpose.msra.mxu0 0.0
        %311 = vmatprep.subr.mxu0 0.0
        %312 = vmatpush1.xpose.msra.mxu0 0.0
        %313 = vmatprep.subr.mxu0 0.0
        %314 = vmatpush1.xpose.msra.mxu0 0.0
        %315 = vmatprep.subr.mxu0 0.0
        %316 = vmatpush1.xpose.msra.mxu0 0.0
        %317 = vmatprep.subr.mxu0 0.0
        %318 = vmatpush1.xpose.msra.mxu0 0.0
        %319 = vmatprep.subr.mxu0 0.0
        %320 = vmatpush1.xpose.msra.mxu0 0.0
        %321 = vmatprep.subr.mxu0 0.0
        %322 = vmatpush1.xpose.msra.mxu0 0.0
        %323 = vmatprep.subr.mxu0 0.0
        %324 = vmatpush1.xpose.msra.mxu0 0.0
        %325 = vmatprep.subr.mxu0 0.0
        %326 = vmatpush1.xpose.msra.mxu0 0.0
        %327 = vmatprep.subr.mxu0 0.0
        %328 = vmatpush1.xpose.msra.mxu0 0.0
        %329 = vmatprep.subr.mxu0 0.0
        %330 = vmatpush1.xpose.msra.mxu0 0.0
        %331 = vmatprep.subr.mxu0 0.0
        %332 = vmatpush1.xpose.msra.mxu0 0.0
        %333 = vmatprep.subr.mxu0 0.0
        %334 = vmatpush1.xpose.msra.mxu0 0.0
        %335 = vmatprep.subr.mxu0 0.0
        %336 = vmatpush1.xpose.msra.mxu0 0.0
        %337 = vmatprep.subr.mxu0 0.0
        %338 = vmatpush1.xpose.msra.mxu0 0.0
        %339 = vmatprep.subr.mxu0 0.0
        %340 = vmatpush1.xpose.msra.mxu0 0.0
        %341 = vmatprep.subr.mxu0 0.0
        %342 = vmatpush1.xpose.msra.mxu0 0.0
        %343 = vmatprep.subr.mxu0 0.0
        %344 = vmatpush1.xpose.msra.mxu0 0.0
        %345 = vmatprep.subr.mxu0 0.0
        %346 = vmatpush1.xpose.msra.mxu0 0.0
        %347 = vmatprep.subr.mxu0 0.0
        %348 = vmatpush1.xpose.msra.mxu0 0.0
        %349 = vmatprep.subr.mxu0 0.0
        %350 = vmatpush1.xpose.msra.mxu0 0.0
        %351 = vmatprep.subr.mxu0 0.0
        %352 = vmatpush1.xpose.msra.mxu0 0.0
        %353 = vmatprep.subr.mxu0 0.0
        %354 = vmatpush1.xpose.msra.mxu0 0.0
        %355 = vmatprep.subr.mxu0 0.0
        %356 = vmatpush1.xpose.msra.mxu0 0.0
        %357 = vmatprep.subr.mxu0 0.0
        %358 = vmatpush1.xpose.msra.mxu0 0.0
        %359 = vmatprep.subr.mxu0 0.0
        %360 = vmatpush1.xpose.msra.mxu0 0.0
        %361 = vmatprep.subr.mxu0 0.0
        %362 = vmatpush1.xpose.msra.mxu0 0.0
        %363 = vmatprep.mubr.f32.mxu0 0.0
        %364 = vmatmul.mubr.f32.gmra.mrb[0].mxu0 %v297
        %v365 = vpop.f32.mrb[0].mxu0
        %v366 = vadd.f32 0.0, %v365
        %v367 = vpop.f32.mrb[0].mxu0
        %368 = vdwg.mxu0
        %v369 = vld [vmem:[#allocation3] sm:$0xff]
        %vm370 = vcmask 64512
        %v371 = vsel %vm370, %v366, -inf
        %372 = vmax.xlane.f32.xlu0 %v371
        %v373 = vpop.xlane.xlu0 %372
        %v374 = vmax.f32 %v369, %v373
        %v375 = vsub.f32 %v369, %v374
        %v376 = vmul.f32 %v375, 1.442695
        %v377 = vpow.pop %v376
        %379 = vset.pattern.permute.xlu0 0
        %380 = vperm.xlu0 %379, %v374
        %v381 = vpop.permute.xlu0 %380
        %v383 = vsub.f32 %v366, %v381
        %v384 = vmul.f32 %v383, 1.442695
        %v385 = vpow.pop %v384
        %v386 = vld [vmem:[#allocation5] sm:$0xff]
        %388 = vset.pattern.permute.xlu0 0
        %389 = vperm.xlu0 %388, %v377
        %v390 = vpop.permute.xlu0 %389
        %v392 = vmul.f32 %v390, %v386
        %v393 = vld [vmem:[%s254] sm:$0xff]
        %v395 = vsel %vm370, %v385, 0
        %397 = vmatprep.subr.mxu0 0.0
        %398 = vmatpush1.msra.mxu0 %v393
        %399 = vmatprep.subr.mxu0 0.0
        %400 = vmatpush1.msra.mxu0 0.0
        %401 = vmatprep.subr.mxu0 0.0
        %402 = vmatpush1.msra.mxu0 0.0
        %403 = vmatprep.subr.mxu0 0.0
        %404 = vmatpush1.msra.mxu0 0.0
        %405 = vmatprep.subr.mxu0 0.0
        %406 = vmatpush1.msra.mxu0 0.0
        %407 = vmatprep.subr.mxu0 0.0
        %408 = vmatpush1.msra.mxu0 0.0
        %409 = vmatprep.subr.mxu0 0.0
        %410 = vmatpush1.msra.mxu0 0.0
        %411 = vmatprep.subr.mxu0 0.0
        %412 = vmatpush1.msra.mxu0 0.0
        %413 = vmatprep.subr.mxu0 0.0
        %414 = vmatpush1.msra.mxu0 0.0
        %415 = vmatprep.subr.mxu0 0.0
        %416 = vmatpush1.msra.mxu0 0.0
        %417 = vmatprep.subr.mxu0 0.0
        %418 = vmatpush1.msra.mxu0 0.0
        %419 = vmatprep.subr.mxu0 0.0
        %420 = vmatpush1.msra.mxu0 0.0
        %421 = vmatprep.subr.mxu0 0.0
        %422 = vmatpush1.msra.mxu0 0.0
        %423 = vmatprep.subr.mxu0 0.0
        %424 = vmatpush1.msra.mxu0 0.0
        %425 = vmatprep.subr.mxu0 0.0
        %426 = vmatpush1.msra.mxu0 0.0
        %427 = vmatprep.subr.mxu0 0.0
        %428 = vmatpush1.msra.mxu0 0.0
        %429 = vmatprep.subr.mxu0 0.0
        %430 = vmatpush1.msra.mxu0 0.0
        %431 = vmatprep.subr.mxu0 0.0
        %432 = vmatpush1.msra.mxu0 0.0
        %433 = vmatprep.subr.mxu0 0.0
        %434 = vmatpush1.msra.mxu0 0.0
        %435 = vmatprep.subr.mxu0 0.0
        %436 = vmatpush1.msra.mxu0 0.0
        %437 = vmatprep.subr.mxu0 0.0
        %438 = vmatpush1.msra.mxu0 0.0
        %439 = vmatprep.subr.mxu0 0.0
        %440 = vmatpush1.msra.mxu0 0.0
        %441 = vmatprep.subr.mxu0 0.0
        %442 = vmatpush1.msra.mxu0 0.0
        %443 = vmatprep.subr.mxu0 0.0
        %444 = vmatpush1.msra.mxu0 0.0
        %445 = vmatprep.subr.mxu0 0.0
        %446 = vmatpush1.msra.mxu0 0.0
        %447 = vmatprep.subr.mxu0 0.0
        %448 = vmatpush1.msra.mxu0 0.0
        %449 = vmatprep.subr.mxu0 0.0
        %450 = vmatpush1.msra.mxu0 0.0
        %451 = vmatprep.subr.mxu0 0.0
        %452 = vmatpush1.msra.mxu0 0.0
        %453 = vmatprep.subr.mxu0 0.0
        %454 = vmatpush1.msra.mxu0 0.0
        %455 = vmatprep.subr.mxu0 0.0
        %456 = vmatpush1.msra.mxu0 0.0
        %457 = vmatprep.subr.mxu0 0.0
        %458 = vmatpush1.msra.mxu0 0.0
        %459 = vmatprep.subr.mxu0 0.0
        %460 = vmatpush1.msra.mxu0 0.0
        %461 = vmatprep.mubr.f32.mxu0 0.0
        %462 = vmatmul.mubr.f32.gmra.mrb[0].mxu0 %v395
        %v463 = vpop.f32.mrb[0].mxu0
        %v464 = vadd.f32 0.0, %v463
        %v465 = vpop.f32.mrb[0].mxu0
        %466 = vdwg.mxu0
        %v467 = vadd.f32 %v392, %v464
        %468 = vst [vmem:[#allocation5] sm:$0xff] %v467
        %vm469 = vcmask 7168
        %470 = vst.msk [vmem:[#allocation3] sm:$0xff] %vm469, %v374
        // Predicated region
        $region49: #{tpu_custom_call.1} parent=31 // pred_check
          %p471 = pneg %p287
        $region50: #{tpu_custom_call.1} parent=31 // pred_check_branch
          %473 = sbr.rel (%p471) target = $region52
        $region51: #{tpu_custom_call.1} parent=31 // pred_region
          %v474 = vld [vmem:[#allocation5] sm:$0xff]
          %476 = vset.pattern.permute.xlu0 32
          %477 = vperm.xlu0 %476, %v474
          %v478 = vpop.permute.xlu0 %477
          %v480 = vrcp.pop %v478
          %v481 = vmul.f32 %v474, %v480
          %482 = vst [vmem:[%s286] sm:$0xff] %v481
        $region52: #{tpu_custom_call.1} parent=31 // pred_fallthru
          _
        %s483 = sand.u32 %s136, 1
        %s484 = scalar_lea.sflag [#allocation8], %s483
        %s485 = sand.u32 %s136, 1
        %s486 = smul.addr %s485, 8
        %s487 = scalar_lea.vmem [#allocation12], %s486
        // Predicated region
        $region53: #{tpu_custom_call.1} parent=31 // pred_check
          %p488 = pneg %p146
        $region54: #{tpu_custom_call.1} parent=31 // pred_check_branch
          %490 = sbr.rel (%p488) target = $region56
        $region55: #{tpu_custom_call.1} parent=31 // pred_region
          %s492 = ssub.s32 128, 128
          %493 = vsyncadd %s484, %s492
          %s494 = sadd.s32 %s29, %s28
          %s495 = smul.addr %s494, 128
          %s496 = scalar_lea.hbm %s3, %s495
          %s498 = sshll.u32 %s487, 4
          %s499 = int_to_ptr.vmem [resolvable:$true] %s498
          %501 = dma.vmem_to_hbm [thread:$0]  %s499, 128, %s496, %s484
        $region56: #{tpu_custom_call.1} parent=31 // pred_fallthru
          _
      $region32: #{tpu_custom_call.1} parent=5 // pred_fallthru
        _
      %p502 = scmp.le.s32.totalorder 2, %s18
      // Predicated region
      $region57: #{tpu_custom_call.1} parent=5 // pred_check
        %p503 = pneg %p502
      $region58: #{tpu_custom_call.1} parent=5 // pred_check_branch
        %505 = sbr.rel (%p503) target = $region60
      $region59: #{tpu_custom_call.1} parent=5 // pred_region
        %s506 = ssub.s32 %s18, 2
        // Predicated region
        $region61: #{tpu_custom_call.1} parent=59 // pred_check
          %p507 = pneg %p152
        $region62: #{tpu_custom_call.1} parent=59 // pred_check_branch
          %509 = sbr.rel (%p507) target = $region64
        $region63: #{tpu_custom_call.1} parent=59 // pred_region
          %s510 = sand.u32 %s137, 1
          %s511 = scalar_lea.sflag [#allocation8], %s510
          %s512 = sand.u32 %s137, 1
          %s513 = smul.addr %s512, 8
          %s514 = scalar_lea.vmem [#allocation12], %s513
          %515 = dma.done %s511, 128
        $region64: #{tpu_custom_call.1} parent=59 // pred_fallthru
          _
      $region60: #{tpu_custom_call.1} parent=5 // pred_fallthru
        _
    $region6: #{tpu_custom_call.1} parent=1 // loop_footer
      %s22 = sadd.s32 1, %s18
    $region7: #{tpu_custom_call.1} parent=1 // loop_footer_branch
      %17 = sbr.rel target = $region3
    $region8: #{tpu_custom_call.1} parent=1 // loop_exit
      _
    %516 = vsyncpa [#allocation7], 1
    %s517 = scalar_lea.sflag [#allocation7], 1
    %518 = vsyncpa %s517, 1
    %519 = vsyncpa [#allocation10], 1
    %s520 = scalar_lea.sflag [#allocation10], 1
    %521 = vsyncpa %s520, 1
    %522 = vsyncpa [#allocation8], 1
    %s523 = scalar_lea.sflag [#allocation8], 1
    %524 = vsyncpa %s523, 1

</llo_original>
